<compile_context>
chip_gen: v6e
topology: v6e:2x2x1
jax: 0.10.0
libtpu: 0.0.40
codegen_flags: <defaults>
</compile_context>

<pallas_src>
import functools

import jax
import jax.numpy as jnp
import numpy as np
from jax.experimental import pallas as pl
from jax.experimental.pallas import tpu as pltpu

_LANE = 128
_SUBLANE = 8
_MIN_TILE = _SUBLANE * _LANE  # 1024 samples = one (8, 128) f32 vreg


def _round_up(x, m):
    return (x + m - 1) // m * m


def _cdiv(a, b):
    return -(-a // b)


def _gcn_loss_kernel(cw_ref, lab_ref, logit_ref, wnll_ref, wsum_ref, *,
                     num_classes):
    """One (n_par, n_tiles) grid step.

    cw_ref:    (C,) f32 class weights in SMEM
    lab_ref:   (tile_rows, 128) int32 labels, -1 marks padding
    logit_ref: (C, tile_rows, 128) f32 logits, samples sublane+lane dense
    wnll_ref / wsum_ref: (8, 128) f32 partial-sum output blocks, resident in
                         VMEM across the "arbitrary" (N-tile) axis.
    """
    i = pl.program_id(1)

    @pl.when(i == 0)
    def _init():
        wnll_ref[...] = jnp.zeros_like(wnll_ref)
        wsum_ref[...] = jnp.zeros_like(wsum_ref)

    logits = logit_ref[...]            # (C, tr, 128) f32
    labels = lab_ref[...]              # (tr, 128) int32

    # ---- softmax statistics over the (small, static) class axis ------------
    # Unrolled over C: every op is a dense (tr, 128) VPU/EUP elementwise op.
    # TODO(synk): for large C, switch to axis-0 reductions + one-hot gather.
    m = logits[0]
    for k in range(1, num_classes):
        m = jnp.maximum(m, logits[k])
    sexp = jnp.exp(logits[0] - m)
    for k in range(1, num_classes):
        sexp = sexp + jnp.exp(logits[k] - m)
    lse = jnp.log(sexp) + m            # per-sample log-sum-exp, (tr, 128)

    # ---- gather target logit & per-sample class weight via C selects -------
    # (padding label -1 matches nothing -> weight 0 -> contributes nothing)
    tgt = jnp.zeros_like(m)
    wgt = jnp.zeros_like(m)
    for k in range(num_classes):
        is_k = labels == k
        tgt = jnp.where(is_k, logits[k], tgt)
        wgt = jnp.where(is_k, cw_ref[k], wgt)

    nll = lse - tgt                    # -log softmax[target], (tr, 128)

    # ---- accumulate into the vreg-shaped (8, 128) output blocks ------------
    tr = nll.shape[0]
    wnll_ref[...] += jnp.sum(
        (wgt * nll).reshape(tr // _SUBLANE, _SUBLANE, _LANE), axis=0)
    wsum_ref[...] += jnp.sum(
        wgt.reshape(tr // _SUBLANE, _SUBLANE, _LANE), axis=0)


def gcn_loss(outputs, y_train, class_weights, w_layer1, w_layer2,
             weight_decay, *, tile_n=131072):
    """Pallas-fused gcnLoss forward.

    outputs:       (N, C) float32 logits
    y_train:       (N,)   int32 class indices
    class_weights: (C,)   float32
    w_layer1/2:    2-D float32 weight matrices of the two GCN layers
    """
    n, c = outputs.shape

    # ---- tile sizing: big lane+sublane-dense N tiles, capped by VMEM -------
    # double-buffered logits+labels per step ~= 2*(c+1)*tile_n*4 bytes; keep
    # it well under the 16 MiB (v5e) scoped-VMEM default.
    vmem_budget = 6 * 1024 * 1024
    cap = max(_MIN_TILE,
              (vmem_budget // (8 * (c + 1))) // _MIN_TILE * _MIN_TILE)
    tile_n = max(_MIN_TILE,
                 min(_round_up(tile_n, _MIN_TILE), cap, _round_up(n, _MIN_TILE)))

    tiles_total = _cdiv(n, tile_n)
    n_par = 2 if tiles_total >= 2 else 1          # use both TCs on v7x
    n_tiles = _cdiv(tiles_total, n_par)
    n_pad = n_par * n_tiles * tile_n
    rows_total = n_pad // _LANE
    tile_rows = tile_n // _LANE

    # ---- layout plumbing (pure XLA): samples sublane+lane dense -------------
    # TODO(synk): have the upstream GCN layer-2 matmul emit (C, N) directly /
    # fuse this loss into it to avoid this transpose+pad HBM round trip.
    logits_t = jnp.pad(outputs.astype(jnp.float32).T, ((0, 0), (0, n_pad - n)))
    logits_3d = logits_t.reshape(c, rows_total, _LANE)
    labels = jnp.pad(y_train.astype(jnp.int32), (0, n_pad - n),
                     constant_values=-1)
    labels_2d = labels.reshape(rows_total, _LANE)
    cw = class_weights.astype(jnp.float32).reshape(c)

    kernel = functools.partial(_gcn_loss_kernel, num_classes=c)

    wnll, wsum = pl.pallas_call(
        kernel,
        out_shape=(jax.ShapeDtypeStruct((n_par * _SUBLANE, _LANE), jnp.float32),
                   jax.ShapeDtypeStruct((n_par * _SUBLANE, _LANE), jnp.float32)),
        grid_spec=pltpu.PrefetchScalarGridSpec(
            num_scalar_prefetch=0,
            grid=(n_par, n_tiles),
            in_specs=[
                pl.BlockSpec(memory_space=pltpu.SMEM),             # class weights (C,)
                pl.BlockSpec((tile_rows, _LANE),
                             lambda p, i: (p * n_tiles + i, 0)),    # labels
                pl.BlockSpec((c, tile_rows, _LANE),
                             lambda p, i: (0, p * n_tiles + i, 0)),  # logits
            ],
            out_specs=[
                pl.BlockSpec((_SUBLANE, _LANE), lambda p, i: (p, 0)),  # sum(w*nll)
                pl.BlockSpec((_SUBLANE, _LANE), lambda p, i: (p, 0)),  # sum(w)
            ],
        ),
        compiler_params=pltpu.CompilerParams(
            dimension_semantics=("parallel", "arbitrary")),
    )(cw, labels_2d, logits_3d)

    # ---- finalize (tiny scalar XLA): weighted mean + L2 weight decay --------
    # L2 term kept out of the kernel per perf review so the weight slabs never
    # occupy VMEM across the whole grid.
    l2 = weight_decay * (jnp.sum(jnp.square(w_layer1.astype(jnp.float32))) +
                         jnp.sum(jnp.square(w_layer2.astype(jnp.float32))))
    # torch CrossEntropyLoss(weight=...) default reduction: weighted mean
    # (0/0 -> NaN matches PyTorch if every label's weight is zero).
    return l2 + jnp.sum(wnll) / jnp.sum(wsum)


def _reference_loss(outputs, y_train, class_weights, w1, w2, weight_decay):
    """Pure-JAX reference mirroring the PyTorch module."""
    logp = jax.nn.log_softmax(outputs, axis=-1)
    nll = -jnp.take_along_axis(logp, y_train[:, None].astype(jnp.int32),
                               axis=-1)[:, 0]
    w = class_weights[y_train.astype(jnp.int32)]
    ce = jnp.sum(w * nll) / jnp.sum(w)
    l2 = weight_decay * (jnp.sum(w1 ** 2) + jnp.sum(w2 ** 2))
    return l2 + ce


if __name__ == "__main__":
    key = jax.random.PRNGKey(0)
    k_out, k_lab, k_w1, k_w2 = jax.random.split(key, 4)

    # Small shapes consistent with a 2-class GCN:
    #   N = 8 nodes, C = 2 classes, GCN layer1: 32 -> 16, layer2: 16 -> 2
    N, C = 8, 2
    F_IN, HID = 32, 16
    WEIGHT_DECAY = 5e-4

    outputs = jax.random.normal(k_out, (N, C), dtype=jnp.float32)      # logits
    y_train = jax.random.randint(k_lab, (N,), 0, C, dtype=jnp.int32)   # labels
    class_weights = jnp.array([1.0, 1.0], dtype=jnp.float32)

    # Deterministically initialized synthetic GCN layer weights
    # (the model.layers{1,2}.vars referenced by the loss).
    w_layer1 = jax.random.normal(k_w1, (F_IN, HID), dtype=jnp.float32) * 0.1
    w_layer2 = jax.random.normal(k_w2, (HID, C), dtype=jnp.float32) * 0.1

    # TODO(synk): at these toy sizes launch + wrapper ops dominate; the real
    # end-to-end win is fusing this loss into the upstream GCN layer-2 kernel.
    loss = gcn_loss(outputs, y_train, class_weights, w_layer1, w_layer2,
                    WEIGHT_DECAY)
    loss = jax.block_until_ready(loss)

    ref = _reference_loss(outputs, y_train, class_weights, w_layer1, w_layer2,
                          WEIGHT_DECAY)
    np.testing.assert_allclose(np.asarray(loss), np.asarray(ref),
                               rtol=1e-5, atol=1e-5)

    print("KERNEL_OK")
</pallas_src>

<mosaic_0001>
module attributes {stable_mosaic.version = 11 : i64} {
  func.func @_gcn_loss_kernel(%arg0: i32, %arg1: i32, %arg2: memref<2xf32, #tpu.memory_space<smem>>, %arg3: memref<8x128xi32, #tpu.memory_space<vmem>>, %arg4: memref<2x8x128xf32, #tpu.memory_space<vmem>>, %arg5: memref<8x128xf32, #tpu.memory_space<vmem>>, %arg6: memref<8x128xf32, #tpu.memory_space<vmem>>) attributes {dimension_semantics = [#tpu.dimension_semantics<parallel>, #tpu.dimension_semantics<arbitrary>], iteration_bounds = array<i64: 1, 1>, scalar_prefetch = 0 : i64, scratch_operands = 0 : i64, tpu.core_type = #tpu.core_type<tc>, window_params = [{transform_indices = @transform_0, window_bounds = array<i64: 2>}, {transform_indices = @transform_1, window_bounds = array<i64: 8, 128>}, {transform_indices = @transform_2, window_bounds = array<i64: 2, 8, 128>}, {transform_indices = @transform_3, window_bounds = array<i64: 8, 128>}, {transform_indices = @transform_4, window_bounds = array<i64: 8, 128>}]} {
    %c0_i32 = arith.constant 0 : i32
    %0 = arith.cmpi eq, %arg1, %c0_i32 : i32
    %1 = arith.extui %0 : i1 to i32
    %c0_i32_0 = arith.constant 0 : i32
    %2 = arith.cmpi ne, %1, %c0_i32_0 : i32
    scf.if %2 {
      %cst_18 = arith.constant 0.000000e+00 : f32
      %51 = vector.broadcast %cst_18 : f32 to vector<8x128xf32>
      %c0_19 = arith.constant 0 : index
      %c0_20 = arith.constant 0 : index
      %52 = vector.load %arg5[%c0_19, %c0_20] : memref<8x128xf32, #tpu.memory_space<vmem>>, vector<8x128xf32>
      tpu.vector_store %arg5[%c0_19, %c0_20], %51 {strides = array<i32>} : memref<8x128xf32, #tpu.memory_space<vmem>>, vector<8x128xf32>,
      %cst_21 = arith.constant 0.000000e+00 : f32
      %53 = vector.broadcast %cst_21 : f32 to vector<8x128xf32>
      %c0_22 = arith.constant 0 : index
      %c0_23 = arith.constant 0 : index
      %54 = vector.load %arg6[%c0_22, %c0_23] : memref<8x128xf32, #tpu.memory_space<vmem>>, vector<8x128xf32>
      tpu.vector_store %arg6[%c0_22, %c0_23], %53 {strides = array<i32>} : memref<8x128xf32, #tpu.memory_space<vmem>>, vector<8x128xf32>,
    } else {
    }
    %c0 = arith.constant 0 : index
    %c0_1 = arith.constant 0 : index
    %c0_2 = arith.constant 0 : index
    %3 = vector.load %arg4[%c0, %c0_1, %c0_2] : memref<2x8x128xf32, #tpu.memory_space<vmem>>, vector<2x8x128xf32>
    %c0_3 = arith.constant 0 : index
    %c0_4 = arith.constant 0 : index
    %4 = vector.load %arg3[%c0_3, %c0_4] : memref<8x128xi32, #tpu.memory_space<vmem>>, vector<8x128xi32>
    %5 = vector.extract_strided_slice %3 {offsets = [0, 0, 0], sizes = [1, 8, 128], strides = [1, 1, 1]} : vector<2x8x128xf32> to vector<1x8x128xf32>
    %6 = vector.shape_cast %5 : vector<1x8x128xf32> to vector<8x128xf32>
    %7 = vector.extract_strided_slice %3 {offsets = [1, 0, 0], sizes = [1, 8, 128], strides = [1, 1, 1]} : vector<2x8x128xf32> to vector<1x8x128xf32>
    %8 = vector.shape_cast %7 : vector<1x8x128xf32> to vector<8x128xf32>
    %9 = arith.maximumf %6, %8 : vector<8x128xf32>
    %10 = vector.extract_strided_slice %3 {offsets = [0, 0, 0], sizes = [1, 8, 128], strides = [1, 1, 1]} : vector<2x8x128xf32> to vector<1x8x128xf32>
    %11 = vector.shape_cast %10 : vector<1x8x128xf32> to vector<8x128xf32>
    %12 = arith.subf %11, %9 : vector<8x128xf32>
    %13 = math.exp %12 : vector<8x128xf32>
    %14 = vector.extract_strided_slice %3 {offsets = [1, 0, 0], sizes = [1, 8, 128], strides = [1, 1, 1]} : vector<2x8x128xf32> to vector<1x8x128xf32>
    %15 = vector.shape_cast %14 : vector<1x8x128xf32> to vector<8x128xf32>
    %16 = arith.subf %15, %9 : vector<8x128xf32>
    %17 = math.exp %16 : vector<8x128xf32>
    %18 = arith.addf %13, %17 : vector<8x128xf32>
    %19 = math.log %18 : vector<8x128xf32>
    %20 = arith.addf %19, %9 : vector<8x128xf32>
    %cst = arith.constant 0.000000e+00 : f32
    %21 = vector.broadcast %cst : f32 to vector<8x128xf32>
    %cst_5 = arith.constant 0.000000e+00 : f32
    %22 = vector.broadcast %cst_5 : f32 to vector<8x128xf32>
    %c0_i32_6 = arith.constant 0 : i32
    %23 = vector.broadcast %c0_i32_6 : i32 to vector<8x128xi32>
    %24 = arith.cmpi eq, %4, %23 : vector<8x128xi32>
    %25 = vector.extract_strided_slice %3 {offsets = [0, 0, 0], sizes = [1, 8, 128], strides = [1, 1, 1]} : vector<2x8x128xf32> to vector<1x8x128xf32>
    %26 = vector.shape_cast %25 : vector<1x8x128xf32> to vector<8x128xf32>
    %27 = arith.select %24, %26, %21 : vector<8x128xi1>, vector<8x128xf32>
    %c0_7 = arith.constant 0 : index
    %28 = memref.load %arg2[%c0_7] : memref<2xf32, #tpu.memory_space<smem>>
    %29 = vector.broadcast %28 : f32 to vector<8x128xf32>
    %30 = arith.select %24, %29, %22 : vector<8x128xi1>, vector<8x128xf32>
    %c1_i32 = arith.constant 1 : i32
    %31 = vector.broadcast %c1_i32 : i32 to vector<8x128xi32>
    %32 = arith.cmpi eq, %4, %31 : vector<8x128xi32>
    %33 = vector.extract_strided_slice %3 {offsets = [1, 0, 0], sizes = [1, 8, 128], strides = [1, 1, 1]} : vector<2x8x128xf32> to vector<1x8x128xf32>
    %34 = vector.shape_cast %33 : vector<1x8x128xf32> to vector<8x128xf32>
    %35 = arith.select %32, %34, %27 : vector<8x128xi1>, vector<8x128xf32>
    %c1 = arith.constant 1 : index
    %36 = memref.load %arg2[%c1] : memref<2xf32, #tpu.memory_space<smem>>
    %37 = vector.broadcast %36 : f32 to vector<8x128xf32>
    %38 = arith.select %32, %37, %30 : vector<8x128xi1>, vector<8x128xf32>
    %39 = arith.subf %20, %35 : vector<8x128xf32>
    %c0_8 = arith.constant 0 : index
    %c0_9 = arith.constant 0 : index
    %40 = vector.load %arg5[%c0_8, %c0_9] : memref<8x128xf32, #tpu.memory_space<vmem>>, vector<8x128xf32>
    %41 = arith.mulf %38, %39 : vector<8x128xf32>
    %42 = vector.shape_cast %41 : vector<8x128xf32> to vector<1x8x128xf32>
    %cst_10 = arith.constant dense<0.000000e+00> : vector<8x128xf32>
    %43 = vector.multi_reduction <add>, %42, %cst_10 [0] : vector<1x8x128xf32> to vector<8x128xf32>
    %44 = arith.addf %40, %43 : vector<8x128xf32>
    %c0_11 = arith.constant 0 : index
    %c0_12 = arith.constant 0 : index
    %45 = vector.load %arg5[%c0_11, %c0_12] : memref<8x128xf32, #tpu.memory_space<vmem>>, vector<8x128xf32>
    tpu.vector_store %arg5[%c0_11, %c0_12], %44 {strides = array<i32>} : memref<8x128xf32, #tpu.memory_space<vmem>>, vector<8x128xf32>,
    %c0_13 = arith.constant 0 : index
    %c0_14 = arith.constant 0 : index
    %46 = vector.load %arg6[%c0_13, %c0_14] : memref<8x128xf32, #tpu.memory_space<vmem>>, vector<8x128xf32>
    %47 = vector.shape_cast %38 : vector<8x128xf32> to vector<1x8x128xf32>
    %cst_15 = arith.constant dense<0.000000e+00> : vector<8x128xf32>
    %48 = vector.multi_reduction <add>, %47, %cst_15 [0] : vector<1x8x128xf32> to vector<8x128xf32>
    %49 = arith.addf %46, %48 : vector<8x128xf32>
    %c0_16 = arith.constant 0 : index
    %c0_17 = arith.constant 0 : index
    %50 = vector.load %arg6[%c0_16, %c0_17] : memref<8x128xf32, #tpu.memory_space<vmem>>, vector<8x128xf32>
    tpu.vector_store %arg6[%c0_16, %c0_17], %49 {strides = array<i32>} : memref<8x128xf32, #tpu.memory_space<vmem>>, vector<8x128xf32>,
    return
  }
  func.func @transform_0(%arg0: i32, %arg1: i32) -> i32 {
    %c0_i32 = arith.constant 0 : i32
    %c0_i32_0 = arith.constant 0 : i32
    return %c0_i32 : i32
  }
  func.func @transform_1(%arg0: i32, %arg1: i32) -> (i32, i32) {
    %c1_i32 = arith.constant 1 : i32
    %0 = arith.muli %arg0, %c1_i32 : i32
    %1 = arith.addi %0, %arg1 : i32
    %c0_i32 = arith.constant 0 : i32
    %c0_i32_0 = arith.constant 0 : i32
    return %1, %c0_i32 : i32, i32
  }
  func.func @transform_2(%arg0: i32, %arg1: i32) -> (i32, i32, i32) {
    %c1_i32 = arith.constant 1 : i32
    %0 = arith.muli %arg0, %c1_i32 : i32
    %1 = arith.addi %0, %arg1 : i32
    %c0_i32 = arith.constant 0 : i32
    %c0_i32_0 = arith.constant 0 : i32
    %c0_i32_1 = arith.constant 0 : i32
    return %c0_i32, %1, %c0_i32_0 : i32, i32, i32
  }
  func.func @transform_3(%arg0: i32, %arg1: i32) -> (i32, i32) {
    %c0_i32 = arith.constant 0 : i32
    %c0_i32_0 = arith.constant 0 : i32
    return %arg0, %c0_i32 : i32, i32
  }
  func.func @transform_4(%arg0: i32, %arg1: i32) -> (i32, i32) {
    %c0_i32 = arith.constant 0 : i32
    %c0_i32_0 = arith.constant 0 : i32
    return %arg0, %c0_i32 : i32, i32
  }
}

</mosaic_0001>

<llo_original>
// kernel: tpu_custom_call.1
$region0: #{tpu_custom_call.1}
  #allocation0 [shape = 'u32[]', space=smem, size = 0x4, offset = 0x4, fixed_abs, tag = 'smem constant byte address 0x4 - core index']
  #allocation1 [shape = 'u32[144,128]{1,0:T(1,128)}', space=vmem, size = 0x12000, scoped, tag = 'internal scratch']
  %s0 = inlined_call_operand.hbm [shape: f32[2], index: 0, kind: input, shape index: {}]
  %s1 = inlined_call_operand.hbm [shape: s32[8,128], index: 1, kind: input, shape index: {}]
  %s2 = inlined_call_operand.hbm [shape: f32[2,8,128], index: 2, kind: input, shape index: {}]
  %s3 = inlined_call_operand.hbm [shape: f32[8,128], index: 3, kind: output, shape index: {0}]
  %s4 = inlined_call_operand.hbm [shape: f32[8,128], index: 4, kind: output, shape index: {1}]
  %5 = xla_tuple %s3, %s4
  %s6 = sld [smem:[#allocation0]]
  $region46: #{tpu_custom_call.1} parent=0
    _
  %s8 = ssub.s32 1, %s6
  %s9 = scalar_select 0, %s8, %s6
  $region1: #{tpu_custom_call.1} parent=0
    #allocation2 [shape = 'u8[512]{0}', space=smem, size = 0x200, scoped, tag = 'input window, operand 0, single buffered']
    #allocation3 [shape = 's32[1]{0}', space=sflag, size = 0x4, scoped, tag = 'scoped memory for tpu_custom_call.1']
    #allocation4 [shape = 's32[1]{0}', space=sflag, size = 0x4, scoped, tag = 'scoped memory for tpu_custom_call.1']
    #allocation5 [shape = 's32[1]{0}', space=sflag, size = 0x4, scoped, tag = 'scoped memory for tpu_custom_call.1']
    #allocation6 [shape = 'u8[4096]{0}', space=vmem, size = 0x1000, scoped, tag = 'input window, operand 1, single buffered']
    #allocation7 [shape = 'u8[8192]{0}', space=vmem, size = 0x2000, scoped, tag = 'input window, operand 2, single buffered']
    #allocation8 [shape = 's32[1]{0}', space=sflag, size = 0x4, scoped, tag = 'scoped memory for tpu_custom_call.1']
    #allocation9 [shape = 'u8[4096]{0}', space=vmem, size = 0x1000, scoped, tag = 'output window, operand 0, single buffered']
    #allocation10 [shape = 'u8[4096]{0}', space=vmem, size = 0x1000, scoped, tag = 'output window, operand 1, single buffered']
    #allocation11 [shape = 's32[1]{0}', space=sflag, size = 0x4, scoped, tag = 'scoped memory for tpu_custom_call.1']
    %10 = vsyncpa [#allocation5], 0
    %11 = vsyncpa [#allocation3], 0
    %12 = vsyncpa [#allocation8], 0
    %13 = vsyncpa [#allocation4], 0
    %14 = vsyncpa [#allocation11], 0
    // Predicated region
    $region2: #{tpu_custom_call.1} parent=1 // pred_check
      _
    $region3: #{tpu_custom_call.1} parent=1 // pred_check_branch
      %16 = sbr.rel (0) target = $region5
    $region4: #{tpu_custom_call.1} parent=1 // pred_region
      %s18 = ssub.s32 16, 16
      %19 = vsyncadd [#allocation5], %s18
      %22 = dma.hbm_to_smem %s0, 16, [#allocation2], [#allocation5]
    $region5: #{tpu_custom_call.1} parent=1 // pred_fallthru
      _
    // Predicated region
    $region6: #{tpu_custom_call.1} parent=1 // pred_check
      _
    $region7: #{tpu_custom_call.1} parent=1 // pred_check_branch
      %24 = sbr.rel (0) target = $region9
    $region8: #{tpu_custom_call.1} parent=1 // pred_region
      %s25 = sadd.s32 0, 0
      %s27 = ssub.s32 128, 128
      %28 = vsyncadd [#allocation3], %s27
      %s29 = smul.addr %s25, 128
      %s30 = scalar_lea.hbm %s1, %s29
      %s32 = sshll.u32 [#allocation6], 4
      %s33 = int_to_ptr.vmem [resolvable:$true] %s32
      %35 = dma.hbm_to_vmem [thread:$0]  %s30, 128, %s33, [#allocation3]
    $region9: #{tpu_custom_call.1} parent=1 // pred_fallthru
      _
    // Predicated region
    $region10: #{tpu_custom_call.1} parent=1 // pred_check
      _
    $region11: #{tpu_custom_call.1} parent=1 // pred_check_branch
      %37 = sbr.rel (0) target = $region13
    $region12: #{tpu_custom_call.1} parent=1 // pred_region
      %s38 = sadd.s32 0, 0
      %s40 = ssub.s32 256, 256
      %41 = vsyncadd [#allocation8], %s40
      %s42 = smul.addr %s38, 128
      %s43 = scalar_lea.hbm %s2, %s42
      %s44 = sshll.u32 [#allocation7], 4
      %s45 = int_to_ptr.vmem [resolvable:$true] %s44
      %50 = dma.hbm_to_vmem [thread:$0]  %s43, 256, %s45, [#allocation8], 128, 128, 8
    $region13: #{tpu_custom_call.1} parent=1 // pred_fallthru
      _
    // Predicated region
    $region14: #{tpu_custom_call.1} parent=1 // pred_check
      _
    $region15: #{tpu_custom_call.1} parent=1 // pred_check_branch
      %52 = sbr.rel (0) target = $region17
    $region16: #{tpu_custom_call.1} parent=1 // pred_region
      %53 = dma.done [#allocation5], 16
    $region17: #{tpu_custom_call.1} parent=1 // pred_fallthru
      _
    // Predicated region
    $region18: #{tpu_custom_call.1} parent=1 // pred_check
      _
    $region19: #{tpu_custom_call.1} parent=1 // pred_check_branch
      %55 = sbr.rel (0) target = $region21
    $region20: #{tpu_custom_call.1} parent=1 // pred_region
      %56 = dma.done [#allocation3], 128
    $region21: #{tpu_custom_call.1} parent=1 // pred_fallthru
      _
    // Predicated region
    $region22: #{tpu_custom_call.1} parent=1 // pred_check
      _
    $region23: #{tpu_custom_call.1} parent=1 // pred_check_branch
      %58 = sbr.rel (0) target = $region25
    $region24: #{tpu_custom_call.1} parent=1 // pred_region
      %59 = dma.done [#allocation8], 256
    $region25: #{tpu_custom_call.1} parent=1 // pred_fallthru
      _
    %60 = sfence
    %s61 = sadd.s32 0, 0
    %s62 = sadd.s32 0, 0
    %p63 = scmp.eq.s32.totalorder 0, 0
    // Predicated region
    $region26: #{tpu_custom_call.1} parent=1 // pred_check
      %p64 = pneg %p63
    $region27: #{tpu_custom_call.1} parent=1 // pred_check_branch
      %66 = sbr.rel (%p64) target = $region29
    $region28: #{tpu_custom_call.1} parent=1 // pred_region
      %67 = vst [vmem:[#allocation9] sm:$0xff] 0.0
      %68 = vst [vmem:[#allocation10] sm:$0xff] 0.0
    $region29: #{tpu_custom_call.1} parent=1 // pred_fallthru
      _
    %v69 = vld [vmem:[#allocation7] sm:$0xff]
    %v70 = vld [vmem:[#allocation7 + $0x8] sm:$0xff]
    %v71 = vld [vmem:[#allocation6] sm:$0xff]
    %v72 = vmax.f32 %v69, %v70
    %v73 = vsub.f32 %v69, %v72
    %v74 = vmul.f32 %v73, 1.442695
    %v75 = vpow.pop %v74
    %v76 = vsub.f32 %v70, %v72
    %v77 = vmul.f32 %v76, 1.442695
    %v78 = vpow.pop %v77
    %v79 = vadd.f32 %v75, %v78
    %v80 = vlog2.pop %v79
    %v81 = vmul.f32 %v80, 0.6931472
    %v82 = vadd.f32 %v81, %v72
    %vm83 = vcmp.eq.s32.totalorder %v71, 0
    %v84 = vsel %vm83, %v69, 0.0
    %s85 = sld [smem:[#allocation2]]
    %v86 = vstv %s85
    %v87 = vsel %vm83, %v86, 0.0
    %vm88 = vcmp.eq.s32.totalorder %v71, 1
    %v89 = vsel %vm88, %v70, %v84
    %s90 = sld [smem:[#allocation2 + $0x1]]
    %v91 = vstv %s90
    %v92 = vsel %vm88, %v91, %v87
    %v93 = vsub.f32 %v82, %v89
    %v94 = vld [vmem:[#allocation9] sm:$0xff]
    %v95 = vmul.f32 %v92, %v93
    %v96 = vadd.f32 %v95, 0.0
    %v97 = vadd.f32 %v94, %v96
    %98 = vst [vmem:[#allocation9] sm:$0xff] %v97
    %v99 = vld [vmem:[#allocation10] sm:$0xff]
    %v100 = vadd.f32 %v92, 0.0
    %v101 = vadd.f32 %v99, %v100
    %102 = vst [vmem:[#allocation10] sm:$0xff] %v101
    // Predicated region
    $region30: #{tpu_custom_call.1} parent=1 // pred_check
      _
    $region31: #{tpu_custom_call.1} parent=1 // pred_check_branch
      %104 = sbr.rel (0) target = $region33
    $region32: #{tpu_custom_call.1} parent=1 // pred_region
      %s106 = ssub.s32 128, 128
      %107 = vsyncadd [#allocation4], %s106
      %s109 = sshll.u32 [#allocation9], 4
      %s110 = int_to_ptr.vmem [resolvable:$true] %s109
      %112 = dma.vmem_to_hbm [thread:$0]  %s110, 128, %s3, [#allocation4]
    $region33: #{tpu_custom_call.1} parent=1 // pred_fallthru
      _
    // Predicated region
    $region34: #{tpu_custom_call.1} parent=1 // pred_check
      _
    $region35: #{tpu_custom_call.1} parent=1 // pred_check_branch
      %114 = sbr.rel (0) target = $region37
    $region36: #{tpu_custom_call.1} parent=1 // pred_region
      %s116 = ssub.s32 128, 128
      %117 = vsyncadd [#allocation11], %s116
      %s119 = sshll.u32 [#allocation10], 4
      %s120 = int_to_ptr.vmem [resolvable:$true] %s119
      %122 = dma.vmem_to_hbm [thread:$0]  %s120, 128, %s4, [#allocation11]
    $region37: #{tpu_custom_call.1} parent=1 // pred_fallthru
      _
    // Predicated region
    $region38: #{tpu_custom_call.1} parent=1 // pred_check
      _
    $region39: #{tpu_custom_call.1} parent=1 // pred_check_branch
      %124 = sbr.rel (0) target = $region41
    $region40: #{tpu_custom_call.1} parent=1 // pred_region
      %125 = dma.done [#allocation4], 128
    $region41: #{tpu_custom_call.1} parent=1 // pred_fallthru
      _
    // Predicated region
    $region42: #{tpu_custom_call.1} parent=1 // pred_check
      _
    $region43: #{tpu_custom_call.1} parent=1 // pred_check_branch
      %127 = sbr.rel (0) target = $region45
    $region44: #{tpu_custom_call.1} parent=1 // pred_region
      %128 = dma.done [#allocation11], 128
    $region45: #{tpu_custom_call.1} parent=1 // pred_fallthru
      _
    %129 = vsyncpa [#allocation3], 1
    %130 = vsyncpa [#allocation8], 1
    %131 = vsyncpa [#allocation4], 1
    %132 = vsyncpa [#allocation11], 1
    %133 = vsyncpa [#allocation5], 1

</llo_original>
